<compile_context>
chip_gen: v6e
topology: v6e:2x2x1
jax: 0.10.0
libtpu: 0.0.40
codegen_flags: <defaults>
</compile_context>

<pallas_src>
import functools

import jax
import jax.numpy as jnp
from jax.experimental import pallas as pl
from jax.experimental.pallas import tpu as pltpu


def _round_up(n, m):
    return ((n + m - 1) // m) * m


_ACTIVATIONS = {
    "tanh": jnp.tanh,
    "relu": lambda v: jnp.maximum(v, 0.0),
    "sigmoid": jax.nn.sigmoid,
}


def _value_mlp_kernel(x_ref, w1_ref, b1_ref, w2_ref, b2_ref, w3t_ref, b3_ref,
                      o_ref, *, matmul_dtype, act):
    # Hidden layer 1: act(x @ W1 + b1).
    # MXU operands in matmul_dtype (bf16 fast path on every generation) with
    # f32 accumulation; bias add + activation run in f32 on the VPU/EUP.
    x = x_ref[...].astype(matmul_dtype)
    h = jnp.dot(x, w1_ref[...], preferred_element_type=jnp.float32)
    h = act(h + b1_ref[...])                  # f32 add (VPU) + f32 act (EUP)
    h = h.astype(matmul_dtype)                # single cast pass to feed the MXU

    # Hidden layer 2: act(h @ W2 + b2).
    h = jnp.dot(h, w2_ref[...], preferred_element_type=jnp.float32)
    h = act(h + b2_ref[...]).astype(matmul_dtype)

    # Value head, lane-dense: contract (1,H2) against (TB,H2) over the last
    # dims (q@k^T pattern) -> (1, TB) row, stored with full 128-lane vst
    # instead of (TB,1) masked stores.
    v = jax.lax.dot_general(
        w3t_ref[...], h,
        dimension_numbers=(((1,), (1,)), ((), ())),
        preferred_element_type=jnp.float32)
    o_ref[...] = v + b3_ref[...]


def value_forward(x, params, *, tb_max=8192, matmul_dtype=jnp.bfloat16,
                  activation="tanh"):
    """Value MLP forward pass as a single batched Pallas kernel.

    x: [B, state_dim] float32 (bf16 also accepted; halves the input DMA)
    params: dict with w1 [D,H1], b1 [1,H1], w2 [H1,H2], b2 [1,H2],
            w3 [H2,1], b3 [1,1]  (float32)
    returns: [B, 1] float32
    """
    B, D = x.shape
    act = _ACTIVATIONS[activation]

    w1 = params["w1"].astype(matmul_dtype)
    w2 = params["w2"].astype(matmul_dtype)
    w3t = params["w3"].T.astype(matmul_dtype)      # (1, H2), lane-major
    b1 = params["b1"].astype(jnp.float32)
    b2 = params["b2"].astype(jnp.float32)
    b3 = params["b3"].astype(jnp.float32)
    H1, H2 = w1.shape[1], w2.shape[1]

    # Batch tile: multiple of 128 so the (1, TB) output block is lane-dense.
    # Prefer >= 2 tiles once B > 128 so v7x's two TensorCores each get work;
    # cap at tb_max (VMEM stays far below every chip's limit at TB=8192).
    if B <= 128:
        TB = 128
    else:
        TB = min(_round_up(tb_max, 128), _round_up((B + 1) // 2, 128))
    num_tiles = pl.cdiv(B, TB)   # ragged tail handled by Pallas block masking

    const2 = lambda a: pl.BlockSpec(a.shape, lambda i: (0, 0))  # VMEM-resident

    param_bytes = sum(int(a.size) * a.dtype.itemsize
                      for a in (w1, b1, w2, b2, w3t, b3))
    cost = pl.CostEstimate(
        flops=2 * B * (D * H1 + H1 * H2 + H2),
        transcendentals=B * (H1 + H2),
        bytes_accessed=int(x.size) * x.dtype.itemsize + B * 4 + param_bytes,
    )

    out = pl.pallas_call(
        functools.partial(_value_mlp_kernel, matmul_dtype=matmul_dtype, act=act),
        out_shape=jax.ShapeDtypeStruct((1, B), jnp.float32),
        grid=(num_tiles,),
        in_specs=[
            pl.BlockSpec((TB, D), lambda i: (i, 0)),   # x: tiled over batch
            const2(w1), const2(b1),
            const2(w2), const2(b2),
            const2(w3t), const2(b3),
        ],
        out_specs=pl.BlockSpec((1, TB), lambda i: (0, i)),  # lane-dense slab
        compiler_params=pltpu.CompilerParams(
            dimension_semantics=("parallel",),          # megacore on v7x
            vmem_limit_bytes=48 * 1024 * 1024),         # v5e default is 16 MiB
        cost_estimate=cost,
    )(x, w1, b1, w2, b2, w3t, b3)

    return out[0, :B].reshape(B, 1)


def init_value_params(key, state_dim, hidden_size=(128, 128)):
    """nn.Linear-style init (uniform(-1/sqrt(fan_in), 1/sqrt(fan_in))),
    with the value_head weight scaled by 0.1 and its bias zeroed."""
    dims = (state_dim,) + tuple(hidden_size)
    params = {}
    keys = jax.random.split(key, 2 * (len(hidden_size) + 1))
    k = 0
    for i in range(len(hidden_size)):
        fan_in, fan_out = dims[i], dims[i + 1]
        bound = 1.0 / jnp.sqrt(fan_in)
        params[f"w{i+1}"] = jax.random.uniform(
            keys[k], (fan_in, fan_out), jnp.float32, -bound, bound); k += 1
        params[f"b{i+1}"] = jax.random.uniform(
            keys[k], (1, fan_out), jnp.float32, -bound, bound); k += 1
    fan_in = dims[-1]
    bound = 1.0 / jnp.sqrt(fan_in)
    i = len(hidden_size)
    params[f"w{i+1}"] = 0.1 * jax.random.uniform(
        keys[k], (fan_in, 1), jnp.float32, -bound, bound); k += 1
    params[f"b{i+1}"] = jnp.zeros((1, 1), jnp.float32)
    return params


def value_forward_ref(x, params):
    """Pure-JAX reference for correctness checking."""
    h = jnp.tanh(x @ params["w1"] + params["b1"])
    h = jnp.tanh(h @ params["w2"] + params["b2"])
    return h @ params["w3"] + params["b3"]


if __name__ == "__main__":
    key = jax.random.PRNGKey(0)
    k_params, k_x, k_x2 = jax.random.split(key, 3)

    state_dim = 16
    hidden_size = (128, 128)
    params = init_value_params(k_params, state_dim, hidden_size)

    # Small test (B=8), f32 matmuls: must match the reference tightly.
    x = jax.random.normal(k_x, (8, state_dim), jnp.float32)
    out = jax.block_until_ready(
        value_forward(x, params, matmul_dtype=jnp.float32))
    ref = value_forward_ref(x, params)
    assert out.shape == (8, 1), out.shape
    assert jnp.allclose(out, ref, atol=1e-5, rtol=1e-5), (
        f"f32 max err {jnp.max(jnp.abs(out - ref))}")

    # Multi-tile test (exercises the batch grid, the ragged final block and
    # the VMEM-resident weights).
    x2 = jax.random.normal(k_x2, (300, state_dim), jnp.float32)
    out2 = jax.block_until_ready(
        value_forward(x2, params, tb_max=128, matmul_dtype=jnp.float32))
    ref2 = value_forward_ref(x2, params)
    assert out2.shape == (300, 1), out2.shape
    assert jnp.allclose(out2, ref2, atol=1e-5, rtol=1e-5), (
        f"f32 tiled max err {jnp.max(jnp.abs(out2 - ref2))}")

    # Default bf16-matmul fast path (used on all chips), relaxed tolerance;
    # exercises the >=2-tile selection (TB=256, 2 tiles, partial tail).
    out_bf16 = jax.block_until_ready(value_forward(x2, params))
    assert out_bf16.shape == (300, 1), out_bf16.shape
    assert jnp.allclose(out_bf16, ref2, atol=2e-2, rtol=2e-2), (
        f"bf16 max err {jnp.max(jnp.abs(out_bf16 - ref2))}")

    print("KERNEL_OK")
</pallas_src>

<mosaic_0001>
module attributes {stable_mosaic.version = 11 : i64} {
  func.func @_value_mlp_kernel(%arg0: i32, %arg1: memref<128x16xf32, #tpu.memory_space<vmem>>, %arg2: memref<16x128xf32, #tpu.memory_space<vmem>>, %arg3: memref<1x128xf32, #tpu.memory_space<vmem>>, %arg4: memref<128x128xf32, #tpu.memory_space<vmem>>, %arg5: memref<1x128xf32, #tpu.memory_space<vmem>>, %arg6: memref<1x128xf32, #tpu.memory_space<vmem>>, %arg7: memref<1x1xf32, #tpu.memory_space<vmem>>, %arg8: memref<1x128xf32, #tpu.memory_space<vmem>>) attributes {dimension_semantics = [#tpu.dimension_semantics<parallel>], iteration_bounds = array<i64: 1>, scalar_prefetch = 0 : i64, scratch_operands = 0 : i64, tpu.core_type = #tpu.core_type<tc>, window_params = [{transform_indices = @transform_0, window_bounds = array<i64: 128, 16>}, {pipeline_mode = #tpu.pipeline_mode<synchronous>, transform_indices = @transform_1, window_bounds = array<i64: 16, 128>}, {pipeline_mode = #tpu.pipeline_mode<synchronous>, transform_indices = @transform_2, window_bounds = array<i64: 1, 128>}, {pipeline_mode = #tpu.pipeline_mode<synchronous>, transform_indices = @transform_3, window_bounds = array<i64: 128, 128>}, {pipeline_mode = #tpu.pipeline_mode<synchronous>, transform_indices = @transform_4, window_bounds = array<i64: 1, 128>}, {pipeline_mode = #tpu.pipeline_mode<synchronous>, transform_indices = @transform_5, window_bounds = array<i64: 1, 128>}, {pipeline_mode = #tpu.pipeline_mode<synchronous>, transform_indices = @transform_6, window_bounds = array<i64: 1, 1>}, {transform_indices = @transform_7, window_bounds = array<i64: 1, 128>}]} {
    %c0 = arith.constant 0 : index
    %c0_0 = arith.constant 0 : index
    %0 = vector.load %arg1[%c0, %c0_0] : memref<128x16xf32, #tpu.memory_space<vmem>>, vector<128x16xf32>
    %c0_1 = arith.constant 0 : index
    %c0_2 = arith.constant 0 : index
    %1 = vector.load %arg2[%c0_1, %c0_2] : memref<16x128xf32, #tpu.memory_space<vmem>>, vector<16x128xf32>
    %cst = arith.constant dense<0.000000e+00> : vector<128x128xf32>
    %2 = tpu.matmul %0, %1, %cst {dimension_numbers = #tpu.dot_dimension_numbers<[1], [0], [0], [1], [0, 0, 1, 1], [], []>} : vector<128x16xf32>, vector<16x128xf32>, vector<128x128xf32> -> vector<128x128xf32>
    %c0_3 = arith.constant 0 : index
    %c0_4 = arith.constant 0 : index
    %3 = vector.load %arg3[%c0_3, %c0_4] : memref<1x128xf32, #tpu.memory_space<vmem>>, vector<1x128xf32>
    %4 = vector.broadcast %3 : vector<1x128xf32> to vector<128x128xf32>
    %5 = arith.addf %2, %4 : vector<128x128xf32>
    %6 = math.tanh %5 : vector<128x128xf32>
    %c0_5 = arith.constant 0 : index
    %c0_6 = arith.constant 0 : index
    %7 = vector.load %arg4[%c0_5, %c0_6] : memref<128x128xf32, #tpu.memory_space<vmem>>, vector<128x128xf32>
    %cst_7 = arith.constant dense<0.000000e+00> : vector<128x128xf32>
    %8 = tpu.matmul %6, %7, %cst_7 {dimension_numbers = #tpu.dot_dimension_numbers<[1], [0], [0], [1], [0, 0, 1, 1], [], []>} : vector<128x128xf32>, vector<128x128xf32>, vector<128x128xf32> -> vector<128x128xf32>
    %c0_8 = arith.constant 0 : index
    %c0_9 = arith.constant 0 : index
    %9 = vector.load %arg5[%c0_8, %c0_9] : memref<1x128xf32, #tpu.memory_space<vmem>>, vector<1x128xf32>
    %10 = vector.broadcast %9 : vector<1x128xf32> to vector<128x128xf32>
    %11 = arith.addf %8, %10 : vector<128x128xf32>
    %12 = math.tanh %11 : vector<128x128xf32>
    %c0_10 = arith.constant 0 : index
    %c0_11 = arith.constant 0 : index
    %13 = vector.load %arg6[%c0_10, %c0_11] : memref<1x128xf32, #tpu.memory_space<vmem>>, vector<1x128xf32>
    %cst_12 = arith.constant dense<0.000000e+00> : vector<1x128xf32>
    %14 = tpu.matmul %13, %12, %cst_12 {dimension_numbers = #tpu.dot_dimension_numbers<[1], [1], [0], [0], [0, 0, 1, 0], [], []>} : vector<1x128xf32>, vector<128x128xf32>, vector<1x128xf32> -> vector<1x128xf32>
    %c0_13 = arith.constant 0 : index
    %c0_14 = arith.constant 0 : index
    %15 = vector.load %arg7[%c0_13, %c0_14] : memref<1x1xf32, #tpu.memory_space<vmem>>, vector<1x1xf32>
    %16 = vector.broadcast %15 : vector<1x1xf32> to vector<1x128xf32>
    %17 = arith.addf %14, %16 : vector<1x128xf32>
    %c0_15 = arith.constant 0 : index
    %c0_16 = arith.constant 0 : index
    %18 = vector.load %arg8[%c0_15, %c0_16] : memref<1x128xf32, #tpu.memory_space<vmem>>, vector<1x128xf32>
    tpu.vector_store %arg8[%c0_15, %c0_16], %17 {strides = array<i32>} : memref<1x128xf32, #tpu.memory_space<vmem>>, vector<1x128xf32>,
    return
  }
  func.func @transform_0(%arg0: i32) -> (i32, i32) {
    %c0_i32 = arith.constant 0 : i32
    %c0_i32_0 = arith.constant 0 : i32
    return %arg0, %c0_i32 : i32, i32
  }
  func.func @transform_1(%arg0: i32) -> (i32, i32) {
    %c0_i32 = arith.constant 0 : i32
    %c0_i32_0 = arith.constant 0 : i32
    %c0_i32_1 = arith.constant 0 : i32
    return %c0_i32, %c0_i32_0 : i32, i32
  }
  func.func @transform_2(%arg0: i32) -> (i32, i32) {
    %c0_i32 = arith.constant 0 : i32
    %c0_i32_0 = arith.constant 0 : i32
    %c0_i32_1 = arith.constant 0 : i32
    return %c0_i32, %c0_i32_0 : i32, i32
  }
  func.func @transform_3(%arg0: i32) -> (i32, i32) {
    %c0_i32 = arith.constant 0 : i32
    %c0_i32_0 = arith.constant 0 : i32
    %c0_i32_1 = arith.constant 0 : i32
    return %c0_i32, %c0_i32_0 : i32, i32
  }
  func.func @transform_4(%arg0: i32) -> (i32, i32) {
    %c0_i32 = arith.constant 0 : i32
    %c0_i32_0 = arith.constant 0 : i32
    %c0_i32_1 = arith.constant 0 : i32
    return %c0_i32, %c0_i32_0 : i32, i32
  }
  func.func @transform_5(%arg0: i32) -> (i32, i32) {
    %c0_i32 = arith.constant 0 : i32
    %c0_i32_0 = arith.constant 0 : i32
    %c0_i32_1 = arith.constant 0 : i32
    return %c0_i32, %c0_i32_0 : i32, i32
  }
  func.func @transform_6(%arg0: i32) -> (i32, i32) {
    %c0_i32 = arith.constant 0 : i32
    %c0_i32_0 = arith.constant 0 : i32
    %c0_i32_1 = arith.constant 0 : i32
    return %c0_i32, %c0_i32_0 : i32, i32
  }
  func.func @transform_7(%arg0: i32) -> (i32, i32) {
    %c0_i32 = arith.constant 0 : i32
    %c0_i32_0 = arith.constant 0 : i32
    return %c0_i32, %arg0 : i32, i32
  }
}

</mosaic_0001>

<llo_original>
// kernel: tpu_custom_call.1
$region0: #{tpu_custom_call.1}
  #allocation0 [shape = 'u32[]', space=smem, size = 0x4, offset = 0x4, fixed_abs, tag = 'smem constant byte address 0x4 - core index']
  #allocation1 [shape = 'u32[144,128]{1,0:T(1,128)}', space=vmem, size = 0x12000, scoped, tag = 'internal scratch']
  #allocation2 [shape = 'f32[1,1]{1,0:T(1,128)S(1)}', space=vmem, size = 0x200, scoped, tag = 'scoped memory for tpu_custom_call.1']
  %s0 = inlined_call_operand.hbm [shape: f32[8,16], index: 0, kind: input, shape index: {}]
  %s1 = inlined_call_operand.hbm [shape: f32[16,128], index: 1, kind: input, shape index: {}]
  %s2 = inlined_call_operand.vmem [shape: f32[1,128], index: 2, kind: input, shape index: {}]
  %s3 = inlined_call_operand.hbm [shape: f32[128,128], index: 3, kind: input, shape index: {}]
  %s4 = inlined_call_operand.vmem [shape: f32[1,128], index: 4, kind: input, shape index: {}]
  %s5 = inlined_call_operand.vmem [shape: f32[1,128], index: 5, kind: input, shape index: {}]
  %s6 = inlined_call_operand.<no memory space> [shape: f32[1,1], index: 6, kind: input, shape index: {}]
  %s7 = inlined_call_operand.hbm [shape: f32[1,8], index: 7, kind: output, shape index: {}]
  %s8 = sld [smem:[#allocation0]]
  $region50: #{tpu_custom_call.1} parent=0
    _
  %s10 = ssub.s32 1, %s8
  %s11 = scalar_select 0, %s10, %s8
  %v12 = vstv %s6
  %13 = vst [vmem:[#allocation2] sm:$0x1] %v12
  $region1: #{tpu_custom_call.1} parent=0
    #allocation3 [shape = 'u8[65536]{0}', space=vmem, size = 0x10000, scoped, tag = 'input window, operand 0, single buffered']
    #allocation4 [shape = 's32[1]{0}', space=sflag, size = 0x4, scoped, tag = 'scoped memory for tpu_custom_call.1']
    #allocation5 [shape = 's32[1]{0}', space=sflag, size = 0x4, scoped, tag = 'scoped memory for tpu_custom_call.1']
    #allocation6 [shape = 'u8[8192]{0}', space=vmem, size = 0x2000, scoped, tag = 'input window, operand 1, single buffered']
    #allocation7 [shape = 's32[1]{0}', space=sflag, size = 0x4, scoped, tag = 'scoped memory for tpu_custom_call.1']
    #allocation8 [shape = 'u8[65536]{0}', space=vmem, size = 0x10000, scoped, tag = 'input window, operand 3, single buffered']
    #allocation9 [shape = 'u8[512]{0}', space=vmem, size = 0x400, scoped, tag = 'output window, operand 0, single buffered']
    %14 = vsyncpa [#allocation4], 0
    %15 = vsyncpa [#allocation7], 0
    %16 = vsyncpa [#allocation5], 0
    // Predicated region
    $region2: #{tpu_custom_call.1} parent=1 // pred_check
      _
    $region3: #{tpu_custom_call.1} parent=1 // pred_check_branch
      %18 = sbr.rel (0) target = $region5
    $region4: #{tpu_custom_call.1} parent=1 // pred_region
      %s20 = ssub.s32 2048, 128
      %21 = vsyncadd [#allocation4], %s20
      %s22 = sshll.u32 [#allocation3], 4
      %s23 = int_to_ptr.vmem [resolvable:$true] %s22
      %28 = dma.hbm_to_vmem [thread:$0]  %s0, 128, %s23, [#allocation4], 128, 128, 8
    $region5: #{tpu_custom_call.1} parent=1 // pred_fallthru
      _
    // Predicated region
    $region6: #{tpu_custom_call.1} parent=1 // pred_check
      _
    $region7: #{tpu_custom_call.1} parent=1 // pred_check_branch
      %30 = sbr.rel (0) target = $region9
    $region8: #{tpu_custom_call.1} parent=1 // pred_region
      %s32 = ssub.s32 256, 256
      %33 = vsyncadd [#allocation7], %s32
      %s34 = sshll.u32 [#allocation6], 4
      %s35 = int_to_ptr.vmem [resolvable:$true] %s34
      %40 = dma.hbm_to_vmem [thread:$0]  %s1, 256, %s35, [#allocation7], 128, 128, 8
    $region9: #{tpu_custom_call.1} parent=1 // pred_fallthru
      _
    // Predicated region
    $region10: #{tpu_custom_call.1} parent=1 // pred_check
      _
    $region11: #{tpu_custom_call.1} parent=1 // pred_check_branch
      %42 = sbr.rel (0) target = $region13
    $region12: #{tpu_custom_call.1} parent=1 // pred_region
      _
    $region13: #{tpu_custom_call.1} parent=1 // pred_fallthru
      _
    // Predicated region
    $region14: #{tpu_custom_call.1} parent=1 // pred_check
      _
    $region15: #{tpu_custom_call.1} parent=1 // pred_check_branch
      %44 = sbr.rel (0) target = $region17
    $region16: #{tpu_custom_call.1} parent=1 // pred_region
      %s46 = ssub.s32 2048, 2048
      %47 = vsyncadd [#allocation7], %s46
      %s48 = sshll.u32 [#allocation8], 4
      %s49 = int_to_ptr.vmem [resolvable:$true] %s48
      %54 = dma.hbm_to_vmem [thread:$0]  %s3, 2048, %s49, [#allocation7], 128, 128, 8
    $region17: #{tpu_custom_call.1} parent=1 // pred_fallthru
      _
    // Predicated region
    $region18: #{tpu_custom_call.1} parent=1 // pred_check
      _
    $region19: #{tpu_custom_call.1} parent=1 // pred_check_branch
      %56 = sbr.rel (0) target = $region21
    $region20: #{tpu_custom_call.1} parent=1 // pred_region
      _
    $region21: #{tpu_custom_call.1} parent=1 // pred_fallthru
      _
    // Predicated region
    $region22: #{tpu_custom_call.1} parent=1 // pred_check
      _
    $region23: #{tpu_custom_call.1} parent=1 // pred_check_branch
      %58 = sbr.rel (0) target = $region25
    $region24: #{tpu_custom_call.1} parent=1 // pred_region
      _
    $region25: #{tpu_custom_call.1} parent=1 // pred_fallthru
      _
    // Predicated region
    $region26: #{tpu_custom_call.1} parent=1 // pred_check
      _
    $region27: #{tpu_custom_call.1} parent=1 // pred_check_branch
      %60 = sbr.rel (0) target = $region29
    $region28: #{tpu_custom_call.1} parent=1 // pred_region
      _
    $region29: #{tpu_custom_call.1} parent=1 // pred_fallthru
      _
    // Predicated region
    $region30: #{tpu_custom_call.1} parent=1 // pred_check
      _
    $region31: #{tpu_custom_call.1} parent=1 // pred_check_branch
      %62 = sbr.rel (0) target = $region33
    $region32: #{tpu_custom_call.1} parent=1 // pred_region
      %63 = dma.done [#allocation4], 2048
    $region33: #{tpu_custom_call.1} parent=1 // pred_fallthru
      _
    // Predicated region
    $region34: #{tpu_custom_call.1} parent=1 // pred_check
      _
    $region35: #{tpu_custom_call.1} parent=1 // pred_check_branch
      %65 = sbr.rel (0) target = $region37
    $region36: #{tpu_custom_call.1} parent=1 // pred_region
      %66 = dma.done [#allocation7], 256
    $region37: #{tpu_custom_call.1} parent=1 // pred_fallthru
      _
    // Predicated region
    $region38: #{tpu_custom_call.1} parent=1 // pred_check
      _
    $region39: #{tpu_custom_call.1} parent=1 // pred_check_branch
      %68 = sbr.rel (0) target = $region41
    $region40: #{tpu_custom_call.1} parent=1 // pred_region
      %69 = dma.done [#allocation7], 2048
    $region41: #{tpu_custom_call.1} parent=1 // pred_fallthru
      _
    %v70 = vld [vmem:[#allocation3] sm:$0xff]
    %v71 = vld [vmem:[#allocation3 + $0x8] sm:$0xff]
    %v72 = vld [vmem:[#allocation3 + $0x10] sm:$0xff]
    %v73 = vld [vmem:[#allocation3 + $0x18] sm:$0xff]
    %v74 = vld [vmem:[#allocation3 + $0x20] sm:$0xff]
    %v75 = vld [vmem:[#allocation3 + $0x28] sm:$0xff]
    %v76 = vld [vmem:[#allocation3 + $0x30] sm:$0xff]
    %v77 = vld [vmem:[#allocation3 + $0x38] sm:$0xff]
    %v78 = vld [vmem:[#allocation3 + $0x40] sm:$0xff]
    %v79 = vld [vmem:[#allocation3 + $0x48] sm:$0xff]
    %v80 = vld [vmem:[#allocation3 + $0x50] sm:$0xff]
    %v81 = vld [vmem:[#allocation3 + $0x58] sm:$0xff]
    %v82 = vld [vmem:[#allocation3 + $0x60] sm:$0xff]
    %v83 = vld [vmem:[#allocation3 + $0x68] sm:$0xff]
    %v84 = vld [vmem:[#allocation3 + $0x70] sm:$0xff]
    %v85 = vld [vmem:[#allocation3 + $0x78] sm:$0xff]
    %v86 = vld [vmem:[#allocation6] sm:$0xff]
    %v87 = vld [vmem:[#allocation6 + $0x8] sm:$0xff]
    %v88 = vld [vmem:[%s2] sm:$0x1]
    %v90 = vlaneseq
    %v91 = vshrl.u32 %v90, 7
    %v92 = vsub.s32 0, %v91
    %v93 = vrot.slane %v88, %v92
    %vm95 = vcmask 130048
    %v97 = vsel %vm95, %v70, 0
    %v100 = vsel %vm95, %v71, 0
    %v103 = vsel %vm95, %v72, 0
    %v106 = vsel %vm95, %v73, 0
    %v109 = vsel %vm95, %v74, 0
    %v112 = vsel %vm95, %v75, 0
    %v115 = vsel %vm95, %v76, 0
    %v118 = vsel %vm95, %v77, 0
    %v121 = vsel %vm95, %v78, 0
    %v124 = vsel %vm95, %v79, 0
    %v127 = vsel %vm95, %v80, 0
    %v130 = vsel %vm95, %v81, 0
    %v133 = vsel %vm95, %v82, 0
    %v136 = vsel %vm95, %v83, 0
    %v139 = vsel %vm95, %v84, 0
    %v142 = vsel %vm95, %v85, 0
    %144 = vmatprep.subr.mxu0 0.0
    %145 = vmatpush1.msra.mxu0 0.0
    %146 = vmatprep.subr.mxu0 0.0
    %147 = vmatpush1.msra.mxu0 0.0
    %148 = vmatprep.subr.mxu0 0.0
    %149 = vmatpush1.msra.mxu0 0.0
    %150 = vmatprep.subr.mxu0 0.0
    %151 = vmatpush1.msra.mxu0 0.0
    %152 = vmatprep.subr.mxu0 0.0
    %153 = vmatpush1.msra.mxu0 0.0
    %154 = vmatprep.subr.mxu0 0.0
    %155 = vmatpush1.msra.mxu0 0.0
    %156 = vmatprep.subr.mxu0 0.0
    %157 = vmatpush1.msra.mxu0 0.0
    %158 = vmatprep.subr.mxu0 0.0
    %159 = vmatpush1.msra.mxu0 0.0
    %160 = vmatprep.subr.mxu0 0.0
    %161 = vmatpush1.msra.mxu0 0.0
    %162 = vmatprep.subr.mxu0 0.0
    %163 = vmatpush1.msra.mxu0 0.0
    %164 = vmatprep.subr.mxu0 0.0
    %165 = vmatpush1.msra.mxu0 0.0
    %166 = vmatprep.subr.mxu0 0.0
    %167 = vmatpush1.msra.mxu0 0.0
    %168 = vmatprep.subr.mxu0 0.0
    %169 = vmatpush1.msra.mxu0 0.0
    %170 = vmatprep.subr.mxu0 0.0
    %171 = vmatpush1.msra.mxu0 0.0
    %172 = vmatprep.subr.mxu0 0.0
    %173 = vmatpush1.msra.mxu0 %v87
    %174 = vmatprep.subr.mxu0 0.0
    %175 = vmatpush1.msra.mxu0 %v86
    %176 = vmatprep.subr.mxu0 0.0
    %177 = vmatpush2.msra.mxu0 0.0
    %178 = vmatprep.subr.mxu0 0.0
    %179 = vmatpush2.msra.mxu0 0.0
    %180 = vmatprep.subr.mxu0 0.0
    %181 = vmatpush2.msra.mxu0 0.0
    %182 = vmatprep.subr.mxu0 0.0
    %183 = vmatpush2.msra.mxu0 0.0
    %184 = vmatprep.subr.mxu0 0.0
    %185 = vmatpush2.msra.mxu0 0.0
    %186 = vmatprep.subr.mxu0 0.0
    %187 = vmatpush2.msra.mxu0 0.0
    %188 = vmatprep.subr.mxu0 0.0
    %189 = vmatpush2.msra.mxu0 0.0
    %190 = vmatprep.subr.mxu0 0.0
    %191 = vmatpush2.msra.mxu0 0.0
    %192 = vmatprep.subr.mxu0 0.0
    %193 = vmatpush2.msra.mxu0 0.0
    %194 = vmatprep.subr.mxu0 0.0
    %195 = vmatpush2.msra.mxu0 0.0
    %196 = vmatprep.subr.mxu0 0.0
    %197 = vmatpush2.msra.mxu0 0.0
    %198 = vmatprep.subr.mxu0 0.0
    %199 = vmatpush2.msra.mxu0 0.0
    %200 = vmatprep.subr.mxu0 0.0
    %201 = vmatpush2.msra.mxu0 0.0
    %202 = vmatprep.subr.mxu0 0.0
    %203 = vmatpush2.msra.mxu0 0.0
    %204 = vmatprep.subr.mxu0 0.0
    %205 = vmatpush2.msra.mxu0 0.0
    %206 = vmatprep.subr.mxu0 0.0
    %207 = vmatpush2.msra.mxu0 0.0
    %208 = vmatprep.mubr.f32.mxu0 0.0
    %209 = vmatmul.mubr.f32.gmra.mxu0 %v97
    %v210 = vpop.f32.mrf.mxu0
    %v211 = vadd.f32 %v93, %v210
    %v212 = vpop.f32.mrf.mxu0
    %213 = vmatprep.mubr.f32.mxu0 0.0
    %214 = vmatmul.mubr.f32.gmra.mxu0 %v100
    %v215 = vpop.f32.mrf.mxu0
    %v216 = vadd.f32 %v93, %v215
    %v217 = vpop.f32.mrf.mxu0
    %218 = vmatprep.mubr.f32.mxu0 0.0
    %219 = vmatmul.mubr.f32.gmra.mxu0 %v103
    %v220 = vpop.f32.mrf.mxu0
    %v221 = vadd.f32 %v93, %v220
    %v222 = vpop.f32.mrf.mxu0
    %223 = vmatprep.mubr.f32.mxu0 0.0
    %224 = vmatmul.mubr.f32.gmra.mxu0 %v106
    %v225 = vpop.f32.mrf.mxu0
    %v226 = vadd.f32 %v93, %v225
    %v227 = vpop.f32.mrf.mxu0
    %228 = vmatprep.mubr.f32.mxu0 0.0
    %229 = vmatmul.mubr.f32.gmra.mxu0 %v109
    %v230 = vpop.f32.mrf.mxu0
    %v231 = vadd.f32 %v93, %v230
    %v232 = vpop.f32.mrf.mxu0
    %233 = vmatprep.mubr.f32.mxu0 0.0
    %234 = vmatmul.mubr.f32.gmra.mxu0 %v112
    %v235 = vpop.f32.mrf.mxu0
    %v236 = vadd.f32 %v93, %v235
    %v237 = vpop.f32.mrf.mxu0
    %238 = vmatprep.mubr.f32.mxu0 0.0
    %239 = vmatmul.mubr.f32.gmra.mxu0 %v115
    %v240 = vpop.f32.mrf.mxu0
    %v241 = vadd.f32 %v93, %v240
    %v242 = vpop.f32.mrf.mxu0
    %243 = vmatprep.mubr.f32.mxu0 0.0
    %244 = vmatmul.mubr.f32.gmra.mxu0 %v118
    %v245 = vpop.f32.mrf.mxu0
    %v246 = vadd.f32 %v93, %v245
    %v247 = vpop.f32.mrf.mxu0
    %248 = vmatprep.mubr.f32.mxu0 0.0
    %249 = vmatmul.mubr.f32.gmra.mxu0 %v121
    %v250 = vpop.f32.mrf.mxu0
    %v251 = vadd.f32 %v93, %v250
    %v252 = vpop.f32.mrf.mxu0
    %253 = vmatprep.mubr.f32.mxu0 0.0
    %254 = vmatmul.mubr.f32.gmra.mxu0 %v124
    %v255 = vpop.f32.mrf.mxu0
    %v256 = vadd.f32 %v93, %v255
    %v257 = vpop.f32.mrf.mxu0
    %258 = vmatprep.mubr.f32.mxu0 0.0
    %259 = vmatmul.mubr.f32.gmra.mxu0 %v127
    %v260 = vpop.f32.mrf.mxu0
    %v261 = vadd.f32 %v93, %v260
    %v262 = vpop.f32.mrf.mxu0
    %263 = vmatprep.mubr.f32.mxu0 0.0
    %264 = vmatmul.mubr.f32.gmra.mxu0 %v130
    %v265 = vpop.f32.mrf.mxu0
    %v266 = vadd.f32 %v93, %v265
    %v267 = vpop.f32.mrf.mxu0
    %268 = vmatprep.mubr.f32.mxu0 0.0
    %269 = vmatmul.mubr.f32.gmra.mxu0 %v133
    %v270 = vpop.f32.mrf.mxu0
    %v271 = vadd.f32 %v93, %v270
    %v272 = vpop.f32.mrf.mxu0
    %273 = vmatprep.mubr.f32.mxu0 0.0
    %274 = vmatmul.mubr.f32.gmra.mxu0 %v136
    %v275 = vpop.f32.mrf.mxu0
    %v276 = vadd.f32 %v93, %v275
    %v277 = vpop.f32.mrf.mxu0
    %278 = vmatprep.mubr.f32.mxu0 0.0
    %279 = vmatmul.mubr.f32.gmra.mxu0 %v139
    %v280 = vpop.f32.mrf.mxu0
    %v281 = vadd.f32 %v93, %v280
    %v282 = vpop.f32.mrf.mxu0
    %283 = vmatprep.mubr.f32.mxu0 0.0
    %284 = vmatmul.mubr.f32.gmra.mxu0 %v142
    %v285 = vpop.f32.mrf.mxu0
    %v286 = vadd.f32 %v93, %v285
    %v287 = vpop.f32.mrf.mxu0
    %288 = vdwg.mxu0
    %v289 = vtanh.pop %v211
    %v290 = vtanh.pop %v216
    %v291 = vtanh.pop %v221
    %v292 = vtanh.pop %v226
    %v293 = vtanh.pop %v231
    %v294 = vtanh.pop %v236
    %v295 = vtanh.pop %v241
    %v296 = vtanh.pop %v246
    %v297 = vtanh.pop %v251
    %v298 = vtanh.pop %v256
    %v299 = vtanh.pop %v261
    %v300 = vtanh.pop %v266
    %v301 = vtanh.pop %v271
    %v302 = vtanh.pop %v276
    %v303 = vtanh.pop %v281
    %v304 = vtanh.pop %v286
    %v305 = vld [vmem:[#allocation8] sm:$0xff]
    %v306 = vld [vmem:[#allocation8 + $0x8] sm:$0xff]
    %v307 = vld [vmem:[#allocation8 + $0x10] sm:$0xff]
    %v308 = vld [vmem:[#allocation8 + $0x18] sm:$0xff]
    %v309 = vld [vmem:[#allocation8 + $0x20] sm:$0xff]
    %v310 = vld [vmem:[#allocation8 + $0x28] sm:$0xff]
    %v311 = vld [vmem:[#allocation8 + $0x30] sm:$0xff]
    %v312 = vld [vmem:[#allocation8 + $0x38] sm:$0xff]
    %v313 = vld [vmem:[#allocation8 + $0x40] sm:$0xff]
    %v314 = vld [vmem:[#allocation8 + $0x48] sm:$0xff]
    %v315 = vld [vmem:[#allocation8 + $0x50] sm:$0xff]
    %v316 = vld [vmem:[#allocation8 + $0x58] sm:$0xff]
    %v317 = vld [vmem:[#allocation8 + $0x60] sm:$0xff]
    %v318 = vld [vmem:[#allocation8 + $0x68] sm:$0xff]
    %v319 = vld [vmem:[#allocation8 + $0x70] sm:$0xff]
    %v320 = vld [vmem:[#allocation8 + $0x78] sm:$0xff]
    %v321 = vld [vmem:[%s4] sm:$0x1]
    %v323 = vlaneseq
    %v324 = vshrl.u32 %v323, 7
    %v325 = vsub.s32 0, %v324
    %v326 = vrot.slane %v321, %v325
    %328 = vmatprep.subr.mxu0 0.0
    %329 = vmatpush1.msra.mxu0 %v320
    %330 = vmatprep.subr.mxu0 0.0
    %331 = vmatpush1.msra.mxu0 %v319
    %332 = vmatprep.subr.mxu0 0.0
    %333 = vmatpush1.msra.mxu0 %v318
    %334 = vmatprep.subr.mxu0 0.0
    %335 = vmatpush1.msra.mxu0 %v317
    %336 = vmatprep.subr.mxu0 0.0
    %337 = vmatpush1.msra.mxu0 %v316
    %338 = vmatprep.subr.mxu0 0.0
    %339 = vmatpush1.msra.mxu0 %v315
    %340 = vmatprep.subr.mxu0 0.0
    %341 = vmatpush1.msra.mxu0 %v314
    %342 = vmatprep.subr.mxu0 0.0
    %343 = vmatpush1.msra.mxu0 %v313
    %344 = vmatprep.subr.mxu0 0.0
    %345 = vmatpush1.msra.mxu0 %v312
    %346 = vmatprep.subr.mxu0 0.0
    %347 = vmatpush1.msra.mxu0 %v311
    %348 = vmatprep.subr.mxu0 0.0
    %349 = vmatpush1.msra.mxu0 %v310
    %350 = vmatprep.subr.mxu0 0.0
    %351 = vmatpush1.msra.mxu0 %v309
    %352 = vmatprep.subr.mxu0 0.0
    %353 = vmatpush1.msra.mxu0 %v308
    %354 = vmatprep.subr.mxu0 0.0
    %355 = vmatpush1.msra.mxu0 %v307
    %356 = vmatprep.subr.mxu0 0.0
    %357 = vmatpush1.msra.mxu0 %v306
    %358 = vmatprep.subr.mxu0 0.0
    %359 = vmatpush1.msra.mxu0 %v305
    %360 = vmatprep.subr.mxu0 0.0
    %361 = vmatpush2.msra.mxu0 0.0
    %362 = vmatprep.subr.mxu0 0.0
    %363 = vmatpush2.msra.mxu0 0.0
    %364 = vmatprep.subr.mxu0 0.0
    %365 = vmatpush2.msra.mxu0 0.0
    %366 = vmatprep.subr.mxu0 0.0
    %367 = vmatpush2.msra.mxu0 0.0
    %368 = vmatprep.subr.mxu0 0.0
    %369 = vmatpush2.msra.mxu0 0.0
    %370 = vmatprep.subr.mxu0 0.0
    %371 = vmatpush2.msra.mxu0 0.0
    %372 = vmatprep.subr.mxu0 0.0
    %373 = vmatpush2.msra.mxu0 0.0
    %374 = vmatprep.subr.mxu0 0.0
    %375 = vmatpush2.msra.mxu0 0.0
    %376 = vmatprep.subr.mxu0 0.0
    %377 = vmatpush2.msra.mxu0 0.0
    %378 = vmatprep.subr.mxu0 0.0
    %379 = vmatpush2.msra.mxu0 0.0
    %380 = vmatprep.subr.mxu0 0.0
    %381 = vmatpush2.msra.mxu0 0.0
    %382 = vmatprep.subr.mxu0 0.0
    %383 = vmatpush2.msra.mxu0 0.0
    %384 = vmatprep.subr.mxu0 0.0
    %385 = vmatpush2.msra.mxu0 0.0
    %386 = vmatprep.subr.mxu0 0.0
    %387 = vmatpush2.msra.mxu0 0.0
    %388 = vmatprep.subr.mxu0 0.0
    %389 = vmatpush2.msra.mxu0 0.0
    %390 = vmatprep.subr.mxu0 0.0
    %391 = vmatpush2.msra.mxu0 0.0
    %392 = vmatprep.mubr.f32.mxu0 0.0
    %393 = vmatmul.mubr.f32.gmra.mxu0 %v289
    %v394 = vpop.f32.mrf.mxu0
    %v395 = vadd.f32 %v326, %v394
    %v396 = vpop.f32.mrf.mxu0
    %397 = vmatprep.mubr.f32.mxu0 0.0
    %398 = vmatmul.mubr.f32.gmra.mxu0 %v290
    %v399 = vpop.f32.mrf.mxu0
    %v400 = vadd.f32 %v326, %v399
    %v401 = vpop.f32.mrf.mxu0
    %402 = vmatprep.mubr.f32.mxu0 0.0
    %403 = vmatmul.mubr.f32.gmra.mxu0 %v291
    %v404 = vpop.f32.mrf.mxu0
    %v405 = vadd.f32 %v326, %v404
    %v406 = vpop.f32.mrf.mxu0
    %407 = vmatprep.mubr.f32.mxu0 0.0
    %408 = vmatmul.mubr.f32.gmra.mxu0 %v292
    %v409 = vpop.f32.mrf.mxu0
    %v410 = vadd.f32 %v326, %v409
    %v411 = vpop.f32.mrf.mxu0
    %412 = vmatprep.mubr.f32.mxu0 0.0
    %413 = vmatmul.mubr.f32.gmra.mxu0 %v293
    %v414 = vpop.f32.mrf.mxu0
    %v415 = vadd.f32 %v326, %v414
    %v416 = vpop.f32.mrf.mxu0
    %417 = vmatprep.mubr.f32.mxu0 0.0
    %418 = vmatmul.mubr.f32.gmra.mxu0 %v294
    %v419 = vpop.f32.mrf.mxu0
    %v420 = vadd.f32 %v326, %v419
    %v421 = vpop.f32.mrf.mxu0
    %422 = vmatprep.mubr.f32.mxu0 0.0
    %423 = vmatmul.mubr.f32.gmra.mxu0 %v295
    %v424 = vpop.f32.mrf.mxu0
    %v425 = vadd.f32 %v326, %v424
    %v426 = vpop.f32.mrf.mxu0
    %427 = vmatprep.mubr.f32.mxu0 0.0
    %428 = vmatmul.mubr.f32.gmra.mxu0 %v296
    %v429 = vpop.f32.mrf.mxu0
    %v430 = vadd.f32 %v326, %v429
    %v431 = vpop.f32.mrf.mxu0
    %432 = vmatprep.mubr.f32.mxu0 0.0
    %433 = vmatmul.mubr.f32.gmra.mxu0 %v297
    %v434 = vpop.f32.mrf.mxu0
    %v435 = vadd.f32 %v326, %v434
    %v436 = vpop.f32.mrf.mxu0
    %437 = vmatprep.mubr.f32.mxu0 0.0
    %438 = vmatmul.mubr.f32.gmra.mxu0 %v298
    %v439 = vpop.f32.mrf.mxu0
    %v440 = vadd.f32 %v326, %v439
    %v441 = vpop.f32.mrf.mxu0
    %442 = vmatprep.mubr.f32.mxu0 0.0
    %443 = vmatmul.mubr.f32.gmra.mxu0 %v299
    %v444 = vpop.f32.mrf.mxu0
    %v445 = vadd.f32 %v326, %v444
    %v446 = vpop.f32.mrf.mxu0
    %447 = vmatprep.mubr.f32.mxu0 0.0
    %448 = vmatmul.mubr.f32.gmra.mxu0 %v300
    %v449 = vpop.f32.mrf.mxu0
    %v450 = vadd.f32 %v326, %v449
    %v451 = vpop.f32.mrf.mxu0
    %452 = vmatprep.mubr.f32.mxu0 0.0
    %453 = vmatmul.mubr.f32.gmra.mxu0 %v301
    %v454 = vpop.f32.mrf.mxu0
    %v455 = vadd.f32 %v326, %v454
    %v456 = vpop.f32.mrf.mxu0
    %457 = vmatprep.mubr.f32.mxu0 0.0
    %458 = vmatmul.mubr.f32.gmra.mxu0 %v302
    %v459 = vpop.f32.mrf.mxu0
    %v460 = vadd.f32 %v326, %v459
    %v461 = vpop.f32.mrf.mxu0
    %462 = vmatprep.mubr.f32.mxu0 0.0
    %463 = vmatmul.mubr.f32.gmra.mxu0 %v303
    %v464 = vpop.f32.mrf.mxu0
    %v465 = vadd.f32 %v326, %v464
    %v466 = vpop.f32.mrf.mxu0
    %467 = vmatprep.mubr.f32.mxu0 0.0
    %468 = vmatmul.mubr.f32.gmra.mxu0 %v304
    %v469 = vpop.f32.mrf.mxu0
    %v470 = vadd.f32 %v326, %v469
    %v471 = vpop.f32.mrf.mxu0
    %472 = vdwg.mxu0
    %v473 = vtanh.pop %v395
    %v474 = vtanh.pop %v400
    %v475 = vtanh.pop %v405
    %v476 = vtanh.pop %v410
    %v477 = vtanh.pop %v415
    %v478 = vtanh.pop %v420
    %v479 = vtanh.pop %v425
    %v480 = vtanh.pop %v430
    %v481 = vtanh.pop %v435
    %v482 = vtanh.pop %v440
    %v483 = vtanh.pop %v445
    %v484 = vtanh.pop %v450
    %v485 = vtanh.pop %v455
    %v486 = vtanh.pop %v460
    %v487 = vtanh.pop %v465
    %v488 = vtanh.pop %v470
    %v489 = vld [vmem:[%s5] sm:$0x1]
    %v490 = vld [vmem:[#allocation2] sm:$0x1]
    %492 = vset.pattern.permute.xlu0 0
    %493 = vperm.xlu0 %492, %v490
    %v494 = vpop.permute.xlu0 %493
    %v496 = vlaneseq
    %v497 = vshrl.u32 %v496, 7
    %v498 = vsub.s32 0, %v497
    %v499 = vrot.slane %v494, %v498
    %500 = vmatprep.subr.mxu0 0.0
    %501 = vmatpush1.xpose.msra.mxu0 %v488
    %502 = vmatprep.subr.mxu0 0.0
    %503 = vmatpush1.xpose.msra.mxu0 %v487
    %504 = vmatprep.subr.mxu0 0.0
    %505 = vmatpush1.xpose.msra.mxu0 %v486
    %506 = vmatprep.subr.mxu0 0.0
    %507 = vmatpush1.xpose.msra.mxu0 %v485
    %508 = vmatprep.subr.mxu0 0.0
    %509 = vmatpush1.xpose.msra.mxu0 %v484
    %510 = vmatprep.subr.mxu0 0.0
    %511 = vmatpush1.xpose.msra.mxu0 %v483
    %512 = vmatprep.subr.mxu0 0.0
    %513 = vmatpush1.xpose.msra.mxu0 %v482
    %514 = vmatprep.subr.mxu0 0.0
    %515 = vmatpush1.xpose.msra.mxu0 %v481
    %516 = vmatprep.subr.mxu0 0.0
    %517 = vmatpush1.xpose.msra.mxu0 %v480
    %518 = vmatprep.subr.mxu0 0.0
    %519 = vmatpush1.xpose.msra.mxu0 %v479
    %520 = vmatprep.subr.mxu0 0.0
    %521 = vmatpush1.xpose.msra.mxu0 %v478
    %522 = vmatprep.subr.mxu0 0.0
    %523 = vmatpush1.xpose.msra.mxu0 %v477
    %524 = vmatprep.subr.mxu0 0.0
    %525 = vmatpush1.xpose.msra.mxu0 %v476
    %526 = vmatprep.subr.mxu0 0.0
    %527 = vmatpush1.xpose.msra.mxu0 %v475
    %528 = vmatprep.subr.mxu0 0.0
    %529 = vmatpush1.xpose.msra.mxu0 %v474
    %530 = vmatprep.subr.mxu0 0.0
    %531 = vmatpush1.xpose.msra.mxu0 %v473
    %532 = vmatprep.subr.mxu0 0.0
    %533 = vmatpush2.xpose.msra.mxu0 0.0
    %534 = vmatprep.subr.mxu0 0.0
    %535 = vmatpush2.xpose.msra.mxu0 0.0
    %536 = vmatprep.subr.mxu0 0.0
    %537 = vmatpush2.xpose.msra.mxu0 0.0
    %538 = vmatprep.subr.mxu0 0.0
    %539 = vmatpush2.xpose.msra.mxu0 0.0
    %540 = vmatprep.subr.mxu0 0.0
    %541 = vmatpush2.xpose.msra.mxu0 0.0
    %542 = vmatprep.subr.mxu0 0.0
    %543 = vmatpush2.xpose.msra.mxu0 0.0
    %544 = vmatprep.subr.mxu0 0.0
    %545 = vmatpush2.xpose.msra.mxu0 0.0
    %546 = vmatprep.subr.mxu0 0.0
    %547 = vmatpush2.xpose.msra.mxu0 0.0
    %548 = vmatprep.subr.mxu0 0.0
    %549 = vmatpush2.xpose.msra.mxu0 0.0
    %550 = vmatprep.subr.mxu0 0.0
    %551 = vmatpush2.xpose.msra.mxu0 0.0
    %552 = vmatprep.subr.mxu0 0.0
    %553 = vmatpush2.xpose.msra.mxu0 0.0
    %554 = vmatprep.subr.mxu0 0.0
    %555 = vmatpush2.xpose.msra.mxu0 0.0
    %556 = vmatprep.subr.mxu0 0.0
    %557 = vmatpush2.xpose.msra.mxu0 0.0
    %558 = vmatprep.subr.mxu0 0.0
    %559 = vmatpush2.xpose.msra.mxu0 0.0
    %560 = vmatprep.subr.mxu0 0.0
    %561 = vmatpush2.xpose.msra.mxu0 0.0
    %562 = vmatprep.subr.mxu0 0.0
    %563 = vmatpush2.xpose.msra.mxu0 0.0
    %564 = vmatprep.mubr.f32.mxu0 0.0
    %565 = vmatmul.mubr.f32.gmra.mxu0 %v489
    %v566 = vpop.f32.mrf.mxu0
    %v567 = vadd.f32 %v499, %v566
    %v568 = vpop.f32.mrf.mxu0
    %569 = vdwg.mxu0
    %570 = vst [vmem:[#allocation9] sm:$0x1] %v567
    // Predicated region
    $region42: #{tpu_custom_call.1} parent=1 // pred_check
      _
    $region43: #{tpu_custom_call.1} parent=1 // pred_check_branch
      %572 = sbr.rel (0) target = $region45
    $region44: #{tpu_custom_call.1} parent=1 // pred_region
      %s574 = ssub.s32 16, 16
      %575 = vsyncadd [#allocation5], %s574
      %s577 = sshll.u32 [#allocation9], 4
      %s578 = int_to_ptr.vmem [resolvable:$true] %s577
      %580 = dma.vmem_to_hbm [thread:$0]  %s578, 16, %s7, [#allocation5]
    $region45: #{tpu_custom_call.1} parent=1 // pred_fallthru
      _
    // Predicated region
    $region46: #{tpu_custom_call.1} parent=1 // pred_check
      _
    $region47: #{tpu_custom_call.1} parent=1 // pred_check_branch
      %582 = sbr.rel (0) target = $region49
    $region48: #{tpu_custom_call.1} parent=1 // pred_region
      %583 = dma.done [#allocation5], 16
    $region49: #{tpu_custom_call.1} parent=1 // pred_fallthru
      _
    %584 = vsyncpa [#allocation4], 1
    %585 = vsyncpa [#allocation7], 1
    %586 = vsyncpa [#allocation5], 1

</llo_original>
